<compile_context>
chip_gen: v6e
topology: v6e:2x2x1
jax: 0.10.0
libtpu: 0.0.40
codegen_flags: <defaults>
</compile_context>

<pallas_src>
import functools

import jax
import jax.numpy as jnp
from jax.experimental import pallas as pl
from jax.experimental.pallas import tpu as pltpu


def _round_up(x, m):
    return ((x + m - 1) // m) * m


def _largest_divisor_le(n, cap):
    cap = max(1, min(cap, n))
    for d in range(cap, 0, -1):
        if n % d == 0:
            return d
    return 1


def _activate(x, activation, head_num, n_out):
    # PyTorch F.softmax(x, dim=1) is over the per-head channel dim (n_out).
    if activation == 'linear':
        return x
    elif activation == 'relu':
        return jnp.maximum(x, 0.0)
    elif activation == 'sigmoid':
        return jax.nn.sigmoid(x)
    elif activation == 'softmax':
        r, hk = x.shape
        xh = x.reshape(r, head_num, n_out)
        xh = jax.nn.softmax(xh, axis=-1)
        return xh.reshape(r, hk)
    else:
        raise ValueError(f'Unknown activation function: {activation}')


def _mhead_attention_kernel(x_ref, w_ref, bias_ref, hsum_ref, o_ref,
                            num_ref, den_ref, *,
                            att_activation, cla_activation,
                            head_num, n_out, t_total):
    ti = pl.program_id(1)
    nt = pl.num_programs(1)

    # Zero the running sums at the first T tile of each B tile.
    @pl.when(ti == 0)
    def _init():
        num_ref[...] = jnp.zeros_like(num_ref)
        den_ref[...] = jnp.zeros_like(den_ref)

    b_tile, _, t_tile = x_ref.shape
    HK = head_num * n_out
    eps = 1e-07
    needs_mask = (t_total % t_tile) != 0     # static (trace-time) decision

    if needs_mask:
        # Valid-time mask for the (possibly partial) last T tile of the cdiv
        # grid; out-of-bounds block contents are garbage and must not be
        # accumulated.
        t_pos = ti * t_tile + jax.lax.broadcasted_iota(jnp.int32, (t_tile, 1), 0)
        valid = t_pos < t_total                                    # (t_tile, 1)

    w = w_ref[...]                       # (n_in, 2*HK) fused att|cla weights
    bias = bias_ref[...]                 # (1, 2*HK), f32

    for b in range(b_tile):              # static unroll over the small B tile
        # Native-layout tile (n_in, t_tile): contract n_in directly as a
        # transposed-LHS MXU matmul -> no HBM/VMEM transpose of x needed.
        y = jax.lax.dot_general(
            x_ref[b], w,
            dimension_numbers=(((0,), (0,)), ((), ())),
            preferred_element_type=jnp.float32)                    # (t_tile, 2*HK)
        y = y + bias

        att = _activate(y[:, :HK], att_activation, head_num, n_out)
        cla = _activate(y[:, HK:], cla_activation, head_num, n_out)
        att = jnp.clip(att, eps, 1.0 - eps)

        prod = att * cla
        if needs_mask:
            prod = jnp.where(valid, prod, 0.0)
            att = jnp.where(valid, att, 0.0)

        # Streaming pooling: out = sum_t(att*cla) / sum_t(att)  (per head/chan)
        num_ref[b:b + 1, :] += jnp.sum(prod, axis=0, keepdims=True)
        den_ref[b:b + 1, :] += jnp.sum(att, axis=0, keepdims=True)

    # Finalize: normalize, apply head weights and sum heads with one tiny
    # block-diagonal matmul (hsum[h*n_out+o, o'] = head_weight[h]*(o==o')).
    @pl.when(ti == nt - 1)
    def _finalize():
        pooled = num_ref[...] / den_ref[...]                       # (b_tile, HK)
        out = jnp.dot(pooled, hsum_ref[...],
                      preferred_element_type=jnp.float32)           # (b_tile, n_out)
        o_ref[...] = out.reshape(b_tile, 1, n_out).astype(o_ref.dtype)


def _derive_tiling(B, T, n_in, HK, n_out, in_itemsize, b_tile, t_tile):
    """Pick (B_TILE, T_TILE, vmem_limit) from an explicit VMEM byte budget."""
    lane = 128
    try:
        info = pltpu.get_tpu_info()
        vmem_cap = int(getattr(info, "vmem_capacity_bytes", 64 * 1024 * 1024))
    except Exception:
        vmem_cap = 64 * 1024 * 1024      # smallest generation (v7x, per TC)

    budget = (vmem_cap * 3) // 4         # headroom for compiler-internal scratch

    HK2 = 2 * HK
    fixed = (n_in * _round_up(HK2, lane) * in_itemsize        # fused weights (1 buf)
             + 8 * _round_up(HK2, lane) * 4                   # bias (1 buf, padded)
             + _round_up(HK, 8) * _round_up(n_out, lane) * 4  # head-sum matrix
             + 2 * 8 * _round_up(HK, lane) * 4                # num/den accumulators
             + 2 * 8 * _round_up(n_out, lane) * 4)            # output block (dbl buf)
    x_budget = max(budget - fixed, 2 * 1024 * 1024)

    # T tile: whole T if a double-buffered x tile fits, else the largest
    # multiple of 128 that fits (cdiv grid + in-kernel masking handles tails).
    bytes_per_t = n_in * in_itemsize
    max_t = max(1, x_budget // (2 * bytes_per_t))
    if t_tile is not None:
        T_TILE = int(t_tile)
    elif T <= max_t:
        T_TILE = T
    else:
        T_TILE = max(lane, min((max_t // lane) * lane, 8192))
        # TODO(synk): for extremely large n_in even T_TILE=128 can exceed the
        # v7x 64 MiB VMEM; that regime needs an n_in (K) grid axis with a
        # pre-activation f32 scratch accumulator.

    if b_tile is not None:
        B_TILE = int(b_tile)
    else:
        if T_TILE >= T:
            cap = max(1, int(x_budget // (2 * n_in * max(T_TILE, 1) * in_itemsize)))
        else:
            cap = 1
        cap = min(8, cap)
        if B >= 2:
            cap = min(cap, B // 2)   # keep >= 2 B-grid steps (v7x: 2 TensorCores)
        B_TILE = _largest_divisor_le(B, max(1, cap))

    est = (2 * B_TILE * n_in * _round_up(T_TILE, lane) * in_itemsize) + fixed
    vmem_limit = int(min(vmem_cap, max(2 * est, 32 * 1024 * 1024)))
    return B_TILE, T_TILE, vmem_limit


def mhead_attention(x_nchw, w_att, b_att, w_cla, b_cla, head_weight,
                    att_activation='sigmoid', cla_activation='linear',
                    compute_dtype=jnp.bfloat16, b_tile=None, t_tile=None):
    """x_nchw: (B, n_in, T, 1); w_*: (H, n_out, n_in); b_*: (H, n_out)."""
    B, n_in, T, _ = x_nchw.shape
    H, n_out, _ = w_att.shape
    HK = H * n_out

    # Glue (no HBM transpose of x: only the trailing size-1 dim is dropped).
    x = x_nchw[..., 0]                                           # (B, n_in, T)
    wa = jnp.transpose(w_att, (2, 0, 1)).reshape(n_in, HK)       # (n_in, H*n_out)
    wc = jnp.transpose(w_cla, (2, 0, 1)).reshape(n_in, HK)
    wcat = jnp.concatenate([wa, wc], axis=1)                     # (n_in, 2*HK)
    bcat = jnp.concatenate([b_att.reshape(1, HK), b_cla.reshape(1, HK)],
                           axis=1).astype(jnp.float32)           # (1, 2*HK)
    eye = jnp.eye(n_out, dtype=jnp.float32)
    hsum = (head_weight.astype(jnp.float32)[:, None, None] *
            eye[None, :, :]).reshape(HK, n_out)                  # (HK, n_out)

    if compute_dtype is not None:
        # Low-precision matmul inputs; accumulation stays f32 (MXU native).
        x = x.astype(compute_dtype)
        wcat = wcat.astype(compute_dtype)

    in_itemsize = jnp.dtype(x.dtype).itemsize
    B_TILE, T_TILE, vmem_limit = _derive_tiling(
        B, T, n_in, HK, n_out, in_itemsize, b_tile, t_tile)
    grid = (B // B_TILE, pl.cdiv(T, T_TILE))

    kernel = functools.partial(_mhead_attention_kernel,
                               att_activation=att_activation,
                               cla_activation=cla_activation,
                               head_num=H, n_out=n_out, t_total=T)

    trans = 0
    if att_activation in ('sigmoid', 'softmax'):
        trans += B * T * HK
    if cla_activation in ('sigmoid', 'softmax'):
        trans += B * T * HK
    cost = pl.CostEstimate(
        flops=2 * B * T * n_in * (2 * HK) + 2 * B * HK * n_out,
        transcendentals=trans,
        bytes_accessed=(B * n_in * T * in_itemsize
                        + n_in * 2 * HK * in_itemsize
                        + 2 * HK * 4 + HK * n_out * 4 + B * n_out * 4))

    out3 = pl.pallas_call(
        kernel,
        out_shape=jax.ShapeDtypeStruct((B, 1, n_out), jnp.float32),
        grid=grid,
        in_specs=[
            # x in native (B, n_in, T) layout; T_TILE is the (lane) minor dim.
            pl.BlockSpec((B_TILE, n_in, T_TILE), lambda bi, ti: (bi, 0, ti)),
            # Constant-index operands: single-buffered (no wasted 2nd buffer).
            pl.BlockSpec((n_in, 2 * HK), lambda bi, ti: (0, 0),
                         pipeline_mode=pl.Buffered(1)),
            pl.BlockSpec((1, 2 * HK), lambda bi, ti: (0, 0),
                         pipeline_mode=pl.Buffered(1)),
            pl.BlockSpec((HK, n_out), lambda bi, ti: (0, 0),
                         pipeline_mode=pl.Buffered(1)),
        ],
        out_specs=pl.BlockSpec((B_TILE, 1, n_out), lambda bi, ti: (bi, 0, 0)),
        scratch_shapes=[
            pltpu.VMEM((B_TILE, HK), jnp.float32),               # sum_t(att*cla)
            pltpu.VMEM((B_TILE, HK), jnp.float32),               # sum_t(att)
        ],
        compiler_params=pltpu.CompilerParams(
            dimension_semantics=("parallel", "arbitrary"),
            vmem_limit_bytes=vmem_limit),
        cost_estimate=cost,
    )(x, wcat, bcat, hsum)

    return out3[:, 0, :], []


def mhead_attention_ref(x_nchw, w_att, b_att, w_cla, b_cla, head_weight,
                        att_activation, cla_activation):
    """Pure-JAX reference mirroring the PyTorch module exactly."""
    H, n_out, n_in = w_att.shape

    def act(v, activation):
        if activation == 'linear':
            return v
        if activation == 'relu':
            return jnp.maximum(v, 0.0)
        if activation == 'sigmoid':
            return jax.nn.sigmoid(v)
        if activation == 'softmax':
            return jax.nn.softmax(v, axis=1)
        raise ValueError(activation)

    xs = x_nchw[..., 0]                                 # (B, n_in, T)
    outs = []
    for i in range(H):
        att = jnp.einsum('oc,bct->bot', w_att[i], xs) + b_att[i][None, :, None]
        att = act(att, att_activation)
        cla = jnp.einsum('oc,bct->bot', w_cla[i], xs) + b_cla[i][None, :, None]
        cla = act(cla, cla_activation)
        att = jnp.clip(att, 1e-07, 1.0 - 1e-07)
        norm_att = att / jnp.sum(att, axis=2, keepdims=True)
        outs.append(jnp.sum(norm_att * cla, axis=2) * head_weight[i])
    return sum(outs)


if __name__ == "__main__":
    key = jax.random.PRNGKey(0)
    B, n_in, n_out, T, H = 2, 32, 8, 16, 4
    att_activation, cla_activation = 'sigmoid', 'linear'

    ks = jax.random.split(key, 6)
    x = jax.random.normal(ks[0], (B, n_in, T, 1), jnp.float32)
    w_att = jax.random.normal(ks[1], (H, n_out, n_in), jnp.float32) * 0.1
    b_att = jax.random.normal(ks[2], (H, n_out), jnp.float32) * 0.1
    w_cla = jax.random.normal(ks[3], (H, n_out, n_in), jnp.float32) * 0.1
    b_cla = jax.random.normal(ks[4], (H, n_out), jnp.float32) * 0.1
    head_weight = jnp.full((H,), 1.0 / H, jnp.float32)

    ref = mhead_attention_ref(x, w_att, b_att, w_cla, b_cla, head_weight,
                              att_activation, cla_activation)

    # 1) Exact-semantics f32 path.
    out_f32, aux = mhead_attention(x, w_att, b_att, w_cla, b_cla, head_weight,
                                   att_activation, cla_activation,
                                   compute_dtype=None)
    out_f32 = jax.block_until_ready(out_f32)
    assert out_f32.shape == (B, n_out)
    assert aux == []
    assert jnp.allclose(out_f32, ref, rtol=1e-3, atol=1e-5), (out_f32, ref)

    # 2) Default fast path: bf16 matmul inputs, f32 accumulation on the MXU.
    out_bf16, _ = mhead_attention(x, w_att, b_att, w_cla, b_cla, head_weight,
                                  att_activation, cla_activation)
    out_bf16 = jax.block_until_ready(out_bf16)
    assert jnp.allclose(out_bf16, ref, rtol=5e-2, atol=2e-2), (out_bf16, ref)

    # 3) Non-divisible T -> cdiv grid + in-kernel tail masking.
    T2 = 200
    x2 = jax.random.normal(ks[5], (B, n_in, T2, 1), jnp.float32)
    ref2 = mhead_attention_ref(x2, w_att, b_att, w_cla, b_cla, head_weight,
                               att_activation, cla_activation)
    out2, _ = mhead_attention(x2, w_att, b_att, w_cla, b_cla, head_weight,
                              att_activation, cla_activation,
                              compute_dtype=None, t_tile=128)
    out2 = jax.block_until_ready(out2)
    assert out2.shape == (B, n_out)
    assert jnp.allclose(out2, ref2, rtol=1e-3, atol=1e-5), (out2, ref2)

    print("KERNEL_OK")
</pallas_src>

<mosaic_0001>
module attributes {stable_mosaic.version = 11 : i64} {
  func.func @_mhead_attention_kernel(%arg0: i32, %arg1: i32, %arg2: memref<1x32x16xf32, #tpu.memory_space<vmem>>, %arg3: memref<32x64xf32, #tpu.memory_space<vmem>>, %arg4: memref<1x64xf32, #tpu.memory_space<vmem>>, %arg5: memref<32x8xf32, #tpu.memory_space<vmem>>, %arg6: memref<1x1x8xf32, #tpu.memory_space<vmem>>, %arg7: memref<1x32xf32, #tpu.memory_space<vmem>>, %arg8: memref<1x32xf32, #tpu.memory_space<vmem>>) attributes {dimension_semantics = [#tpu.dimension_semantics<parallel>, #tpu.dimension_semantics<arbitrary>], iteration_bounds = array<i64: 2, 1>, scalar_prefetch = 0 : i64, scratch_operands = 2 : i64, tpu.core_type = #tpu.core_type<tc>, window_params = [{transform_indices = @transform_0, window_bounds = array<i64: 1, 32, 16>}, {pipeline_mode = #tpu.pipeline_mode<synchronous>, transform_indices = @transform_1, window_bounds = array<i64: 32, 64>}, {pipeline_mode = #tpu.pipeline_mode<synchronous>, transform_indices = @transform_2, window_bounds = array<i64: 1, 64>}, {pipeline_mode = #tpu.pipeline_mode<synchronous>, transform_indices = @transform_3, window_bounds = array<i64: 32, 8>}, {transform_indices = @transform_4, window_bounds = array<i64: 1, 1, 8>}]} {
    %c0_i32 = arith.constant 0 : i32
    %0 = arith.cmpi eq, %arg1, %c0_i32 : i32
    %1 = arith.extui %0 : i1 to i32
    %c0_i32_0 = arith.constant 0 : i32
    %2 = arith.cmpi ne, %1, %c0_i32_0 : i32
    scf.if %2 {
      %cst_22 = arith.constant 0.000000e+00 : f32
      %35 = vector.broadcast %cst_22 : f32 to vector<1x32xf32>
      %c0_23 = arith.constant 0 : index
      %c0_24 = arith.constant 0 : index
      %36 = vector.load %arg7[%c0_23, %c0_24] : memref<1x32xf32, #tpu.memory_space<vmem>>, vector<1x32xf32>
      tpu.vector_store %arg7[%c0_23, %c0_24], %35 {strides = array<i32>} : memref<1x32xf32, #tpu.memory_space<vmem>>, vector<1x32xf32>,
      %cst_25 = arith.constant 0.000000e+00 : f32
      %37 = vector.broadcast %cst_25 : f32 to vector<1x32xf32>
      %c0_26 = arith.constant 0 : index
      %c0_27 = arith.constant 0 : index
      %38 = vector.load %arg8[%c0_26, %c0_27] : memref<1x32xf32, #tpu.memory_space<vmem>>, vector<1x32xf32>
      tpu.vector_store %arg8[%c0_26, %c0_27], %37 {strides = array<i32>} : memref<1x32xf32, #tpu.memory_space<vmem>>, vector<1x32xf32>,
    } else {
    }
    %c0 = arith.constant 0 : index
    %c0_1 = arith.constant 0 : index
    %3 = vector.load %arg3[%c0, %c0_1] : memref<32x64xf32, #tpu.memory_space<vmem>>, vector<32x64xf32>
    %c0_2 = arith.constant 0 : index
    %c0_3 = arith.constant 0 : index
    %4 = vector.load %arg4[%c0_2, %c0_3] : memref<1x64xf32, #tpu.memory_space<vmem>>, vector<1x64xf32>
    %c0_4 = arith.constant 0 : index
    %c0_5 = arith.constant 0 : index
    %c0_6 = arith.constant 0 : index
    %5 = vector.load %arg2[%c0_4, %c0_5, %c0_6] : memref<1x32x16xf32, #tpu.memory_space<vmem>>, vector<1x32x16xf32>
    %6 = vector.shape_cast %5 : vector<1x32x16xf32> to vector<32x16xf32>
    %cst = arith.constant dense<0.000000e+00> : vector<16x64xf32>
    %7 = tpu.matmul %6, %3, %cst {dimension_numbers = #tpu.dot_dimension_numbers<[0], [0], [1], [1], [0, 1, 1, 1], [], []>} : vector<32x16xf32>, vector<32x64xf32>, vector<16x64xf32> -> vector<16x64xf32>
    %8 = vector.broadcast %4 : vector<1x64xf32> to vector<16x64xf32>
    %9 = arith.addf %7, %8 : vector<16x64xf32>
    %10 = vector.extract_strided_slice %9 {offsets = [0, 0], sizes = [16, 32], strides = [1, 1]} : vector<16x64xf32> to vector<16x32xf32>
    %11 = arith.negf %10 : vector<16x32xf32>
    %12 = math.exp %11 : vector<16x32xf32>
    %cst_7 = arith.constant 1.000000e+00 : f32
    %13 = vector.broadcast %cst_7 : f32 to vector<16x32xf32>
    %14 = arith.addf %13, %12 : vector<16x32xf32>
    %15 = arith.divf %13, %14 : vector<16x32xf32>
    %16 = vector.extract_strided_slice %9 {offsets = [0, 32], sizes = [16, 32], strides = [1, 1]} : vector<16x64xf32> to vector<16x32xf32>
    %cst_8 = arith.constant 1.000000e-07 : f32
    %cst_9 = arith.constant 0.99999988 : f32
    %17 = vector.broadcast %cst_8 : f32 to vector<16x32xf32>
    %18 = arith.maximumf %17, %15 : vector<16x32xf32>
    %19 = vector.broadcast %cst_9 : f32 to vector<16x32xf32>
    %20 = arith.minimumf %19, %18 : vector<16x32xf32>
    %21 = arith.mulf %20, %16 : vector<16x32xf32>
    %c0_10 = arith.constant 0 : index
    %c0_11 = arith.constant 0 : index
    %22 = vector.load %arg7[%c0_10, %c0_11] : memref<1x32xf32, #tpu.memory_space<vmem>>, vector<1x32xf32>
    %cst_12 = arith.constant dense<0.000000e+00> : vector<32xf32>
    %23 = vector.multi_reduction <add>, %21, %cst_12 [0] : vector<16x32xf32> to vector<32xf32>
    %24 = vector.shape_cast %23 : vector<32xf32> to vector<1x32xf32>
    %25 = arith.addf %22, %24 : vector<1x32xf32>
    %c0_13 = arith.constant 0 : index
    %c0_14 = arith.constant 0 : index
    %26 = vector.load %arg7[%c0_13, %c0_14] : memref<1x32xf32, #tpu.memory_space<vmem>>, vector<1x32xf32>
    tpu.vector_store %arg7[%c0_13, %c0_14], %25 {strides = array<i32>} : memref<1x32xf32, #tpu.memory_space<vmem>>, vector<1x32xf32>,
    %c0_15 = arith.constant 0 : index
    %c0_16 = arith.constant 0 : index
    %27 = vector.load %arg8[%c0_15, %c0_16] : memref<1x32xf32, #tpu.memory_space<vmem>>, vector<1x32xf32>
    %cst_17 = arith.constant dense<0.000000e+00> : vector<32xf32>
    %28 = vector.multi_reduction <add>, %20, %cst_17 [0] : vector<16x32xf32> to vector<32xf32>
    %29 = vector.shape_cast %28 : vector<32xf32> to vector<1x32xf32>
    %30 = arith.addf %27, %29 : vector<1x32xf32>
    %c0_18 = arith.constant 0 : index
    %c0_19 = arith.constant 0 : index
    %31 = vector.load %arg8[%c0_18, %c0_19] : memref<1x32xf32, #tpu.memory_space<vmem>>, vector<1x32xf32>
    tpu.vector_store %arg8[%c0_18, %c0_19], %30 {strides = array<i32>} : memref<1x32xf32, #tpu.memory_space<vmem>>, vector<1x32xf32>,
    %c0_i32_20 = arith.constant 0 : i32
    %32 = arith.cmpi eq, %arg1, %c0_i32_20 : i32
    %33 = arith.extui %32 : i1 to i32
    %c0_i32_21 = arith.constant 0 : i32
    %34 = arith.cmpi ne, %33, %c0_i32_21 : i32
    scf.if %34 {
      %c0_22 = arith.constant 0 : index
      %c0_23 = arith.constant 0 : index
      %35 = vector.load %arg7[%c0_22, %c0_23] : memref<1x32xf32, #tpu.memory_space<vmem>>, vector<1x32xf32>
      %c0_24 = arith.constant 0 : index
      %c0_25 = arith.constant 0 : index
      %36 = vector.load %arg8[%c0_24, %c0_25] : memref<1x32xf32, #tpu.memory_space<vmem>>, vector<1x32xf32>
      %37 = arith.divf %35, %36 : vector<1x32xf32>
      %c0_26 = arith.constant 0 : index
      %c0_27 = arith.constant 0 : index
      %38 = vector.load %arg5[%c0_26, %c0_27] : memref<32x8xf32, #tpu.memory_space<vmem>>, vector<32x8xf32>
      %cst_28 = arith.constant dense<0.000000e+00> : vector<1x8xf32>
      %39 = tpu.matmul %37, %38, %cst_28 {dimension_numbers = #tpu.dot_dimension_numbers<[1], [0], [0], [1], [0, 0, 1, 1], [], []>} : vector<1x32xf32>, vector<32x8xf32>, vector<1x8xf32> -> vector<1x8xf32>
      %40 = vector.shape_cast %39 : vector<1x8xf32> to vector<1x1x8xf32>
      %c0_29 = arith.constant 0 : index
      %c0_30 = arith.constant 0 : index
      %c0_31 = arith.constant 0 : index
      %41 = vector.load %arg6[%c0_29, %c0_30, %c0_31] : memref<1x1x8xf32, #tpu.memory_space<vmem>>, vector<1x1x8xf32>
      tpu.vector_store %arg6[%c0_29, %c0_30, %c0_31], %40 {strides = array<i32>} : memref<1x1x8xf32, #tpu.memory_space<vmem>>, vector<1x1x8xf32>,
    } else {
    }
    return
  }
  func.func @transform_0(%arg0: i32, %arg1: i32) -> (i32, i32, i32) {
    %c0_i32 = arith.constant 0 : i32
    %c0_i32_0 = arith.constant 0 : i32
    return %arg0, %c0_i32, %arg1 : i32, i32, i32
  }
  func.func @transform_1(%arg0: i32, %arg1: i32) -> (i32, i32) {
    %c0_i32 = arith.constant 0 : i32
    %c0_i32_0 = arith.constant 0 : i32
    %c0_i32_1 = arith.constant 0 : i32
    return %c0_i32, %c0_i32_0 : i32, i32
  }
  func.func @transform_2(%arg0: i32, %arg1: i32) -> (i32, i32) {
    %c0_i32 = arith.constant 0 : i32
    %c0_i32_0 = arith.constant 0 : i32
    %c0_i32_1 = arith.constant 0 : i32
    return %c0_i32, %c0_i32_0 : i32, i32
  }
  func.func @transform_3(%arg0: i32, %arg1: i32) -> (i32, i32) {
    %c0_i32 = arith.constant 0 : i32
    %c0_i32_0 = arith.constant 0 : i32
    %c0_i32_1 = arith.constant 0 : i32
    return %c0_i32, %c0_i32_0 : i32, i32
  }
  func.func @transform_4(%arg0: i32, %arg1: i32) -> (i32, i32, i32) {
    %c0_i32 = arith.constant 0 : i32
    %c0_i32_0 = arith.constant 0 : i32
    %c0_i32_1 = arith.constant 0 : i32
    return %arg0, %c0_i32, %c0_i32_0 : i32, i32, i32
  }
}

</mosaic_0001>

<llo_original>
// kernel: tpu_custom_call.1
$region0: #{tpu_custom_call.1}
  #allocation0 [shape = 'u32[]', space=smem, size = 0x4, offset = 0x4, fixed_abs, tag = 'smem constant byte address 0x4 - core index']
  #allocation1 [shape = 'u32[144,128]{1,0:T(1,128)}', space=vmem, size = 0x12000, scoped, tag = 'internal scratch']
  #allocation2 [shape = 'f32[1,32]{1,0:T(1,128)}', space=vmem, size = 0x200, scoped, tag = 'scratch operand']
  #allocation3 [shape = 'f32[1,32]{1,0:T(1,128)}', space=vmem, size = 0x200, scoped, tag = 'scratch operand']
  %s0 = inlined_call_operand.vmem [shape: f32[2,32,16], index: 0, kind: input, shape index: {}]
  %s1 = inlined_call_operand.vmem [shape: f32[32,64], index: 1, kind: input, shape index: {}]
  %s2 = inlined_call_operand.vmem [shape: f32[1,64], index: 2, kind: input, shape index: {}]
  %s3 = inlined_call_operand.vmem [shape: f32[32,8], index: 3, kind: input, shape index: {}]
  %s4 = inlined_call_operand.hbm [shape: f32[2,1,8], index: 4, kind: output, shape index: {}]
  %s5 = sld [smem:[#allocation0]]
  $region57: #{tpu_custom_call.1} parent=0
    _
  %s7 = ssub.s32 1, %s5
  %s8 = scalar_select 0, %s7, %s5
  $region1: #{tpu_custom_call.1} parent=0
    #allocation4 [shape = 'u8[1024]{0}', space=vmem, size = 0x400, scoped, tag = 'output window, operand 0']
    #allocation5 [shape = 's32[2]{0}', space=sflag, size = 0x8, scoped, tag = 'scoped memory for tpu_custom_call.1']
    %9 = vsyncpa [#allocation5], 0
    %s10 = scalar_lea.sflag [#allocation5], 1
    %11 = vsyncpa %s10, 0
    loop: start=0, step=1, limit=4
    $region2: #{tpu_custom_call.1} parent=1 // loop_pre_header
      _
    $region3: #{tpu_custom_call.1} parent=1 // loop_header
      %s13 = sphi 0, %s17
      %p14 = scmp.ge.s32.totalorder %s13, 4
      %s20 = sphi 0, %s32
      %s21 = sphi 0, %s28
      %s22 = sphi 0, %s20
      %s23 = sphi 0, %s21
      %s24 = sphi 0, %s22
      %s25 = sphi 0, %s23
      %s37 = sphi 0, %s39
      %s40 = sphi 0, %s37
      %s41 = sphi 0, %s40
      %s57 = sphi 0, %s41
      %s61 = sphi 0, %s61
      %s63 = sphi 0, %s61
      %s64 = sphi 0, %s63
      %s78 = sphi 0, %s64
      %s82 = sphi 0, %s82
      %s84 = sphi 0, %s82
      %s85 = sphi 0, %s84
      %s99 = sphi 0, %s85
      %s103 = sphi 0, %s103
      %s105 = sphi 0, %s103
      %s106 = sphi 0, %s105
      %s120 = sphi 0, %s106
      %s126 = sphi 0, %s128
      %s129 = sphi 0, %s126
      %s130 = sphi 0, %s129
      %s146 = sphi 0, %s130
    $region4: #{tpu_custom_call.1} parent=1 // loop_header_branch
      %16 = sbr.rel (%p14) target = $region8
    $region5: #{tpu_custom_call.1} parent=1 // loop_body
      %s18 = ssub.s32 %s13, 1
      %s19 = ssub.s32 %s13, 2
      %s26 = sadd.s32 1, %s21
      %p27 = scmp.ge.s32.totalorder %s26, 1
      %s28 = scalar_select %p27, 0, %s26
      %s29 = sadd.s32 1, %s20
      %s30 = scalar_select %p27, %s29, %s20
      %p31 = scmp.ge.s32.totalorder %s30, 2
      %s32 = scalar_select %p31, 0, %s30
      %s33 = ssub.s32 %s20, %s32
      %s34 = ssub.s32 %s21, %s28
      %s35 = sor.u32 %s33, %s34
      %p36 = scmp.eq.s32.totalorder %s35, 0
      %s38 = sadd.s32 %s37, 1
      %s39 = scalar_select %p36, %s37, %s38
      %p42 = pneg %p36
      %p43 = scmp.eq.s32.totalorder %s13, 1
      %p44 = por %p42, %p43
      %p45 = scmp.ne.s32.totalorder %s37, %s40
      %p46 = scmp.eq.s32.totalorder %s13, 0
      %p47 = por %p45, %p46
      %p48 = scmp.ne.s32.totalorder %s37, %s40
      %p49 = scmp.eq.s32.totalorder %s18, 1
      %p50 = por %p48, %p49
      %p51 = scmp.ne.s32.totalorder %s40, %s41
      %p52 = scmp.eq.s32.totalorder %s18, 0
      %p53 = por %p51, %p52
      %p54 = scmp.ne.s32.totalorder %s40, %s41
      %p55 = scmp.eq.s32.totalorder %s19, 1
      %p56 = por %p54, %p55
      %p58 = scmp.ne.s32.totalorder %s41, %s57
      %p59 = scmp.eq.s32.totalorder %s19, 0
      %p60 = por %p58, %p59
      %s62 = sadd.s32 %s61, 1
      %p65 = scmp.eq.s32.totalorder %s13, 1
      %p66 = scmp.ne.s32.totalorder %s61, %s63
      %p67 = scmp.eq.s32.totalorder %s13, 0
      %p68 = por %p66, %p67
      %p69 = scmp.ne.s32.totalorder %s61, %s63
      %p70 = scmp.eq.s32.totalorder %s18, 1
      %p71 = por %p69, %p70
      %p72 = scmp.ne.s32.totalorder %s63, %s64
      %p73 = scmp.eq.s32.totalorder %s18, 0
      %p74 = por %p72, %p73
      %p75 = scmp.ne.s32.totalorder %s63, %s64
      %p76 = scmp.eq.s32.totalorder %s19, 1
      %p77 = por %p75, %p76
      %p79 = scmp.ne.s32.totalorder %s64, %s78
      %p80 = scmp.eq.s32.totalorder %s19, 0
      %p81 = por %p79, %p80
      %s83 = sadd.s32 %s82, 1
      %p86 = scmp.eq.s32.totalorder %s13, 1
      %p87 = scmp.ne.s32.totalorder %s82, %s84
      %p88 = scmp.eq.s32.totalorder %s13, 0
      %p89 = por %p87, %p88
      %p90 = scmp.ne.s32.totalorder %s82, %s84
      %p91 = scmp.eq.s32.totalorder %s18, 1
      %p92 = por %p90, %p91
      %p93 = scmp.ne.s32.totalorder %s84, %s85
      %p94 = scmp.eq.s32.totalorder %s18, 0
      %p95 = por %p93, %p94
      %p96 = scmp.ne.s32.totalorder %s84, %s85
      %p97 = scmp.eq.s32.totalorder %s19, 1
      %p98 = por %p96, %p97
      %p100 = scmp.ne.s32.totalorder %s85, %s99
      %p101 = scmp.eq.s32.totalorder %s19, 0
      %p102 = por %p100, %p101
      %s104 = sadd.s32 %s103, 1
      %p107 = scmp.eq.s32.totalorder %s13, 1
      %p108 = scmp.ne.s32.totalorder %s103, %s105
      %p109 = scmp.eq.s32.totalorder %s13, 0
      %p110 = por %p108, %p109
      %p111 = scmp.ne.s32.totalorder %s103, %s105
      %p112 = scmp.eq.s32.totalorder %s18, 1
      %p113 = por %p111, %p112
      %p114 = scmp.ne.s32.totalorder %s105, %s106
      %p115 = scmp.eq.s32.totalorder %s18, 0
      %p116 = por %p114, %p115
      %p117 = scmp.ne.s32.totalorder %s105, %s106
      %p118 = scmp.eq.s32.totalorder %s19, 1
      %p119 = por %p117, %p118
      %p121 = scmp.ne.s32.totalorder %s106, %s120
      %p122 = scmp.eq.s32.totalorder %s19, 0
      %p123 = por %p121, %p122
      %s124 = ssub.s32 %s20, %s32
      %p125 = scmp.eq.s32.totalorder %s124, 0
      %s127 = sadd.s32 %s126, 1
      %s128 = scalar_select %p125, %s126, %s127
      %p131 = pneg %p125
      %p132 = scmp.eq.s32.totalorder %s13, 1
      %p133 = por %p131, %p132
      %p134 = scmp.ne.s32.totalorder %s126, %s129
      %p135 = scmp.eq.s32.totalorder %s13, 0
      %p136 = por %p134, %p135
      %p137 = scmp.ne.s32.totalorder %s126, %s129
      %p138 = scmp.eq.s32.totalorder %s18, 1
      %p139 = por %p137, %p138
      %p140 = scmp.ne.s32.totalorder %s129, %s130
      %p141 = scmp.eq.s32.totalorder %s18, 0
      %p142 = por %p140, %p141
      %p143 = scmp.ne.s32.totalorder %s129, %s130
      %p144 = scmp.eq.s32.totalorder %s19, 1
      %p145 = por %p143, %p144
      %p147 = scmp.ne.s32.totalorder %s130, %s146
      %p148 = scmp.eq.s32.totalorder %s19, 0
      %p149 = por %p147, %p148
      %p150 = scmp.le.s32.totalorder 1, %s13
      %p151 = scmp.lt.s32.totalorder %s13, 3
      %p152 = pnand %p150, %p151
      %p153 = pneg %p152
      // Predicated region
      $region9: #{tpu_custom_call.1} parent=5 // pred_check
        _
      $region10: #{tpu_custom_call.1} parent=5 // pred_check_branch
        %155 = sbr.rel (%p152) target = $region12
      $region11: #{tpu_custom_call.1} parent=5 // pred_region
        %s156 = ssub.s32 %s13, 1
        // Predicated region
        $region13: #{tpu_custom_call.1} parent=11 // pred_check
          %p157 = pneg %p74
        $region14: #{tpu_custom_call.1} parent=11 // pred_check_branch
          %159 = sbr.rel (%p157) target = $region16
        $region15: #{tpu_custom_call.1} parent=11 // pred_region
          _
        $region16: #{tpu_custom_call.1} parent=11 // pred_fallthru
          _
        // Predicated region
        $region17: #{tpu_custom_call.1} parent=11 // pred_check
          %p160 = pneg %p95
        $region18: #{tpu_custom_call.1} parent=11 // pred_check_branch
          %162 = sbr.rel (%p160) target = $region20
        $region19: #{tpu_custom_call.1} parent=11 // pred_region
          _
        $region20: #{tpu_custom_call.1} parent=11 // pred_fallthru
          _
        // Predicated region
        $region21: #{tpu_custom_call.1} parent=11 // pred_check
          %p163 = pneg %p116
        $region22: #{tpu_custom_call.1} parent=11 // pred_check_branch
          %165 = sbr.rel (%p163) target = $region24
        $region23: #{tpu_custom_call.1} parent=11 // pred_region
          _
        $region24: #{tpu_custom_call.1} parent=11 // pred_fallthru
          _
      $region12: #{tpu_custom_call.1} parent=5 // pred_fallthru
        _
      %p166 = scmp.lt.s32.totalorder %s13, 2
      // Predicated region
      $region25: #{tpu_custom_call.1} parent=5 // pred_check
        %p167 = pneg %p166
      $region26: #{tpu_custom_call.1} parent=5 // pred_check_branch
        %169 = sbr.rel (%p167) target = $region28
      $region27: #{tpu_custom_call.1} parent=5 // pred_region
        // Predicated region
        $region29: #{tpu_custom_call.1} parent=27 // pred_check
          %p170 = pneg %p47
        $region30: #{tpu_custom_call.1} parent=27 // pred_check_branch
          %172 = sbr.rel (%p170) target = $region32
        $region31: #{tpu_custom_call.1} parent=27 // pred_region
          %p173 = scmp.lt.s32.totalorder %s20, 1
          %s174 = scalar_select %p173, %s20, 1
          %p175 = scmp.lt.s32.totalorder %s21, 0
          %s176 = scalar_select %p175, %s21, 0
          %s177 = smul.addr %s174, 4
          %s178 = sadd.s32 %s176, %s177
          %s179 = smul.addr %s178, 8
          %s180 = scalar_lea.vmem %s0, %s179
        $region32: #{tpu_custom_call.1} parent=27 // pred_fallthru
          _
      $region28: #{tpu_custom_call.1} parent=5 // pred_fallthru
        _
      %p181 = scmp.le.s32.totalorder 1, %s13
      %p182 = scmp.lt.s32.totalorder %s13, 3
      %p183 = pnand %p181, %p182
      %p184 = pneg %p183
      // Predicated region
      $region33: #{tpu_custom_call.1} parent=5 // pred_check
        _
      $region34: #{tpu_custom_call.1} parent=5 // pred_check_branch
        %186 = sbr.rel (%p183) target = $region36
      $region35: #{tpu_custom_call.1} parent=5 // pred_region
        %s187 = ssub.s32 %s13, 1
        %p188 = scmp.lt.s32.totalorder %s22, 1
        %s189 = scalar_select %p188, %s22, 1
        %p190 = scmp.lt.s32.totalorder %s23, 0
        %s191 = scalar_select %p190, %s23, 0
        %s192 = smul.addr %s189, 4
        %s193 = sadd.s32 %s191, %s192
        %s194 = smul.addr %s193, 8
        %s195 = scalar_lea.vmem %s0, %s194
        %p196 = pneg %p53
        %p197 = pneg %p50
        %p198 = pneg %p74
        %p199 = pneg %p71
        %p200 = pneg %p95
        %p201 = pneg %p92
        %p202 = pneg %p116
        %p203 = pneg %p113
        %p204 = pneg %p142
        %p205 = pneg %p139
        %s206 = sand.u32 %s129, 1
        %s207 = scalar_lea.sflag [#allocation5], %s206
        %s208 = sand.u32 %s129, 1
        %s209 = scalar_lea.vmem [#allocation4], %s208
        %p210 = scmp.lt.s32.totalorder %s22, 1
        %s211 = scalar_select %p210, %s22, 1
        %p212 = scmp.lt.s32.totalorder %s23, 0
        %s213 = scalar_select %p212, %s23, 0
        %s214 = smul.addr %s211, 4
        %s215 = sadd.s32 %s213, %s214
        %s216 = smul.addr %s215, 8
        %s217 = scalar_lea.vmem %s0, %s216
        %p218 = scmp.eq.s32.totalorder %s23, 0
        // Predicated region
        $region37: #{tpu_custom_call.1} parent=35 // pred_check
          %p219 = pneg %p218
        $region38: #{tpu_custom_call.1} parent=35 // pred_check_branch
          %221 = sbr.rel (%p219) target = $region40
        $region39: #{tpu_custom_call.1} parent=35 // pred_region
          %vm222 = vcmask 253952
          %223 = vst.msk [vmem:[#allocation2] sm:$0x1] %vm222, 0.0
          %224 = vst.msk [vmem:[#allocation3] sm:$0x1] %vm222, 0.0
        $region40: #{tpu_custom_call.1} parent=35 // pred_fallthru
          _
        %v225 = vld [vmem:[%s1] sm:$0xff]
        %v226 = vld [vmem:[%s1 + $0x8] sm:$0xff]
        %v227 = vld [vmem:[%s1 + $0x10] sm:$0xff]
        %v228 = vld [vmem:[%s1 + $0x18] sm:$0xff]
        %v229 = vld [vmem:[%s2] sm:$0x1]
        %v230 = vld [vmem:[%s217] sm:$0xff]
        %v231 = vld [vmem:[%s217 + $0x8] sm:$0xff]
        %v232 = vld [vmem:[%s217 + $0x10] sm:$0xff]
        %v233 = vld [vmem:[%s217 + $0x18] sm:$0xff]
        %v235 = vlaneseq
        %v236 = vshrl.u32 %v235, 7
        %v237 = vsub.s32 0, %v236
        %v238 = vrot.slane %v229, %v237
        %240 = vxpose.xlu0.b32.start [1/16] %v230, 128
        %241 = vxpose.xlu0.b32.cont [2/16] %v231, 128
        %242 = vxpose.xlu0.b32.cont [3/16] %v232, 128
        %243 = vxpose.xlu0.b32.cont [4/16] %v233, 128
        %244 = vxpose.xlu0.b32.cont [5/16] 0.0, 128
        %245 = vxpose.xlu0.b32.cont [6/16] 0.0, 128
        %246 = vxpose.xlu0.b32.cont [7/16] 0.0, 128
        %247 = vxpose.xlu0.b32.cont [8/16] 0.0, 128
        %248 = vxpose.xlu0.b32.cont [9/16] 0.0, 128
        %249 = vxpose.xlu0.b32.cont [10/16] 0.0, 128
        %250 = vxpose.xlu0.b32.cont [11/16] 0.0, 128
        %251 = vxpose.xlu0.b32.cont [12/16] 0.0, 128
        %252 = vxpose.xlu0.b32.cont [13/16] 0.0, 128
        %253 = vxpose.xlu0.b32.cont [14/16] 0.0, 128
        %254 = vxpose.xlu0.b32.cont [15/16] 0.0, 128
        %255 = vxpose.xlu0.b32.end [16/16] 0.0, 128
        %v256 = vpop.trf.xlu0
        %v257 = vpop.trf.xlu0
        %v258 = vpop.trf.xlu0
        %v259 = vpop.trf.xlu0
        %v260 = vpop.trf.xlu0
        %v261 = vpop.trf.xlu0
        %v262 = vpop.trf.xlu0
        %v263 = vpop.trf.xlu0
        %v264 = vpop.trf.xlu0
        %v265 = vpop.trf.xlu0
        %v266 = vpop.trf.xlu0
        %v267 = vpop.trf.xlu0
        %v268 = vpop.trf.xlu0
        %v269 = vpop.trf.xlu0
        %v270 = vpop.trf.xlu0
        %v271 = vpop.trf.xlu0
        %vm272 = vcmask 261120
        %v274 = vsel %vm272, %v256, 0
        %v277 = vsel %vm272, %v257, 0
        %279 = vmatprep.subr.mxu0 0.0
        %280 = vmatpush1.msra.mxu0 0.0
        %281 = vmatprep.subr.mxu0 0.0
        %282 = vmatpush1.msra.mxu0 0.0
        %283 = vmatprep.subr.mxu0 0.0
        %284 = vmatpush1.msra.mxu0 0.0
        %285 = vmatprep.subr.mxu0 0.0
        %286 = vmatpush1.msra.mxu0 0.0
        %287 = vmatprep.subr.mxu0 0.0
        %288 = vmatpush1.msra.mxu0 0.0
        %289 = vmatprep.subr.mxu0 0.0
        %290 = vmatpush1.msra.mxu0 0.0
        %291 = vmatprep.subr.mxu0 0.0
        %292 = vmatpush1.msra.mxu0 0.0
        %293 = vmatprep.subr.mxu0 0.0
        %294 = vmatpush1.msra.mxu0 0.0
        %295 = vmatprep.subr.mxu0 0.0
        %296 = vmatpush1.msra.mxu0 0.0
        %297 = vmatprep.subr.mxu0 0.0
        %298 = vmatpush1.msra.mxu0 0.0
        %299 = vmatprep.subr.mxu0 0.0
        %300 = vmatpush1.msra.mxu0 0.0
        %301 = vmatprep.subr.mxu0 0.0
        %302 = vmatpush1.msra.mxu0 0.0
        %303 = vmatprep.subr.mxu0 0.0
        %304 = vmatpush1.msra.mxu0 %v228
        %305 = vmatprep.subr.mxu0 0.0
        %306 = vmatpush1.msra.mxu0 %v227
        %307 = vmatprep.subr.mxu0 0.0
        %308 = vmatpush1.msra.mxu0 %v226
        %309 = vmatprep.subr.mxu0 0.0
        %310 = vmatpush1.msra.mxu0 %v225
        %311 = vmatprep.subr.mxu0 0.0
        %312 = vmatpush2.msra.mxu0 0.0
        %313 = vmatprep.subr.mxu0 0.0
        %314 = vmatpush2.msra.mxu0 0.0
        %315 = vmatprep.subr.mxu0 0.0
        %316 = vmatpush2.msra.mxu0 0.0
        %317 = vmatprep.subr.mxu0 0.0
        %318 = vmatpush2.msra.mxu0 0.0
        %319 = vmatprep.subr.mxu0 0.0
        %320 = vmatpush2.msra.mxu0 0.0
        %321 = vmatprep.subr.mxu0 0.0
        %322 = vmatpush2.msra.mxu0 0.0
        %323 = vmatprep.subr.mxu0 0.0
        %324 = vmatpush2.msra.mxu0 0.0
        %325 = vmatprep.subr.mxu0 0.0
        %326 = vmatpush2.msra.mxu0 0.0
        %327 = vmatprep.subr.mxu0 0.0
        %328 = vmatpush2.msra.mxu0 0.0
        %329 = vmatprep.subr.mxu0 0.0
        %330 = vmatpush2.msra.mxu0 0.0
        %331 = vmatprep.subr.mxu0 0.0
        %332 = vmatpush2.msra.mxu0 0.0
        %333 = vmatprep.subr.mxu0 0.0
        %334 = vmatpush2.msra.mxu0 0.0
        %335 = vmatprep.subr.mxu0 0.0
        %336 = vmatpush2.msra.mxu0 0.0
        %337 = vmatprep.subr.mxu0 0.0
        %338 = vmatpush2.msra.mxu0 0.0
        %339 = vmatprep.subr.mxu0 0.0
        %340 = vmatpush2.msra.mxu0 0.0
        %341 = vmatprep.subr.mxu0 0.0
        %342 = vmatpush2.msra.mxu0 0.0
        %343 = vmatprep.mubr.f32.mxu0 0.0
        %344 = vmatmul.mubr.f32.gmra.mxu0 %v274
        %v345 = vpop.f32.mrf.mxu0
        %v346 = vadd.f32 %v238, %v345
        %v347 = vpop.f32.mrf.mxu0
        %348 = vmatprep.mubr.f32.mxu0 0.0
        %349 = vmatmul.mubr.f32.gmra.mxu0 %v277
        %v350 = vpop.f32.mrf.mxu0
        %v351 = vadd.f32 %v238, %v350
        %v352 = vpop.f32.mrf.mxu0
        %353 = vdwg.mxu0
        %v354 = vxor.u32 %v346, 2147483648
        %v355 = vxor.u32 %v351, 2147483648
        %v356 = vmul.f32 %v354, 1.442695
        %v357 = vpow.pop %v356
        %v358 = vmul.f32 %v355, 1.442695
        %v359 = vpow.pop %v358
        %v360 = vadd.f32 %v357, 1.0
        %v361 = vadd.f32 %v359, 1.0
        %v362 = vrcp.pop %v360
        %v363 = vmul.f32 1.0, %v362
        %v364 = vrcp.pop %v361
        %v365 = vmul.f32 1.0, %v364
        %v366 = vmax.f32 %v363, 1e-07
        %v367 = vmax.f32 %v365, 1e-07
        %v368 = vmin.f32 %v366, 0.9999999
        %v369 = vmin.f32 %v367, 0.9999999
        %372 = vrot.lane.b32.xlu0 %v346, 96
        %v373 = vpop.permute.xlu0 %372
        %374 = vrot.lane.b32.xlu0 %v351, 96
        %v375 = vpop.permute.xlu0 %374
        %v378 = vmul.f32 %v368, %v373
        %v379 = vmul.f32 %v369, %v375
        %v380 = vld [vmem:[#allocation2] sm:$0x1]
        %v381 = vsel %vm272, %v378, 0.0
        %v382 = vsel %vm272, %v379, 0.0
        %v383 = vadd.f32 %v381, %v382
        %v384 = vrot.slane %v383, 4
        %v385 = vadd.f32 %v383, %v384
        %v386 = vrot.slane %v385, 2
        %v387 = vadd.f32 %v385, %v386
        %v388 = vrot.slane %v387, 1
        %v389 = vadd.f32 %v387, %v388
        %v390 = vadd.f32 %v380, %v389
        %vm391 = vcmask 253952
        %392 = vst.msk [vmem:[#allocation2] sm:$0x1] %vm391, %v390
        %v393 = vld [vmem:[#allocation3] sm:$0x1]
        %v394 = vsel %vm272, %v368, 0.0
        %v395 = vsel %vm272, %v369, 0.0
        %v396 = vadd.f32 %v394, %v395
        %v397 = vrot.slane %v396, 4
        %v398 = vadd.f32 %v396, %v397
        %v399 = vrot.slane %v398, 2
        %v400 = vadd.f32 %v398, %v399
        %v401 = vrot.slane %v400, 1
        %v402 = vadd.f32 %v400, %v401
        %v403 = vadd.f32 %v393, %v402
        %404 = vst.msk [vmem:[#allocation3] sm:$0x1] %vm391, %v403
        // Predicated region
        $region41: #{tpu_custom_call.1} parent=35 // pred_check
          %p405 = pneg %p218
        $region42: #{tpu_custom_call.1} parent=35 // pred_check_branch
          %407 = sbr.rel (%p405) target = $region44
        $region43: #{tpu_custom_call.1} parent=35 // pred_region
          %v408 = vld [vmem:[#allocation2] sm:$0x1]
          %v409 = vld [vmem:[#allocation3] sm:$0x1]
          %v410 = vrcp.pop %v409
          %v411 = vmul.f32 %v408, %v410
          %v412 = vld [vmem:[%s3] sm:$0xff]
          %v413 = vld [vmem:[%s3 + $0x8] sm:$0xff]
          %v414 = vld [vmem:[%s3 + $0x10] sm:$0xff]
          %v415 = vld [vmem:[%s3 + $0x18] sm:$0xff]
          %v417 = vsel %vm272, %v411, 0
          %419 = vmatprep.subr.mxu0 0.0
          %420 = vmatpush1.msra.mxu0 0.0
          %421 = vmatprep.subr.mxu0 0.0
          %422 = vmatpush1.msra.mxu0 0.0
          %423 = vmatprep.subr.mxu0 0.0
          %424 = vmatpush1.msra.mxu0 0.0
          %425 = vmatprep.subr.mxu0 0.0
          %426 = vmatpush1.msra.mxu0 0.0
          %427 = vmatprep.subr.mxu0 0.0
          %428 = vmatpush1.msra.mxu0 0.0
          %429 = vmatprep.subr.mxu0 0.0
          %430 = vmatpush1.msra.mxu0 0.0
          %431 = vmatprep.subr.mxu0 0.0
          %432 = vmatpush1.msra.mxu0 0.0
          %433 = vmatprep.subr.mxu0 0.0
          %434 = vmatpush1.msra.mxu0 0.0
          %435 = vmatprep.subr.mxu0 0.0
          %436 = vmatpush1.msra.mxu0 0.0
          %437 = vmatprep.subr.mxu0 0.0
          %438 = vmatpush1.msra.mxu0 0.0
          %439 = vmatprep.subr.mxu0 0.0
          %440 = vmatpush1.msra.mxu0 0.0
          %441 = vmatprep.subr.mxu0 0.0
          %442 = vmatpush1.msra.mxu0 0.0
          %443 = vmatprep.subr.mxu0 0.0
          %444 = vmatpush1.msra.mxu0 %v415
          %445 = vmatprep.subr.mxu0 0.0
          %446 = vmatpush1.msra.mxu0 %v414
          %447 = vmatprep.subr.mxu0 0.0
          %448 = vmatpush1.msra.mxu0 %v413
          %449 = vmatprep.subr.mxu0 0.0
          %450 = vmatpush1.msra.mxu0 %v412
          %451 = vmatprep.subr.mxu0 0.0
          %452 = vmatpush2.msra.mxu0 0.0
          %453 = vmatprep.subr.mxu0 0.0
          %454 = vmatpush2.msra.mxu0 0.0
          %455 = vmatprep.subr.mxu0 0.0
          %456 = vmatpush2.msra.mxu0 0.0
          %457 = vmatprep.subr.mxu0 0.0
          %458 = vmatpush2.msra.mxu0 0.0
          %459 = vmatprep.subr.mxu0 0.0
          %460 = vmatpush2.msra.mxu0 0.0
          %461 = vmatprep.subr.mxu0 0.0
          %462 = vmatpush2.msra.mxu0 0.0
          %463 = vmatprep.subr.mxu0 0.0
          %464 = vmatpush2.msra.mxu0 0.0
          %465 = vmatprep.subr.mxu0 0.0
          %466 = vmatpush2.msra.mxu0 0.0
          %467 = vmatprep.subr.mxu0 0.0
          %468 = vmatpush2.msra.mxu0 0.0
          %469 = vmatprep.subr.mxu0 0.0
          %470 = vmatpush2.msra.mxu0 0.0
          %471 = vmatprep.subr.mxu0 0.0
          %472 = vmatpush2.msra.mxu0 0.0
          %473 = vmatprep.subr.mxu0 0.0
          %474 = vmatpush2.msra.mxu0 0.0
          %475 = vmatprep.subr.mxu0 0.0
          %476 = vmatpush2.msra.mxu0 0.0
          %477 = vmatprep.subr.mxu0 0.0
          %478 = vmatpush2.msra.mxu0 0.0
          %479 = vmatprep.subr.mxu0 0.0
          %480 = vmatpush2.msra.mxu0 0.0
          %481 = vmatprep.subr.mxu0 0.0
          %482 = vmatpush2.msra.mxu0 0.0
          %483 = vmatprep.mubr.f32.mxu0 0.0
          %484 = vmatmul.mubr.f32.gmra.mxu0 %v417
          %v485 = vpop.f32.mrf.mxu0
          %v486 = vadd.f32 0.0, %v485
          %v487 = vpop.f32.mrf.mxu0
          %488 = vdwg.mxu0
          %vm489 = vcmask 57344
          %490 = vst.msk [vmem:[%s209] sm:$0x1] %vm489, %v486
        $region44: #{tpu_custom_call.1} parent=35 // pred_fallthru
          _
        %s491 = sand.u32 %s129, 1
        %s492 = scalar_lea.sflag [#allocation5], %s491
        %s493 = sand.u32 %s129, 1
        %s494 = scalar_lea.vmem [#allocation4], %s493
        // Predicated region
        $region45: #{tpu_custom_call.1} parent=35 // pred_check
          %p495 = pneg %p139
        $region46: #{tpu_custom_call.1} parent=35 // pred_check_branch
          %497 = sbr.rel (%p495) target = $region48
        $region47: #{tpu_custom_call.1} parent=35 // pred_region
          %s499 = ssub.s32 16, 16
          %500 = vsyncadd %s492, %s499
          %s501 = smul.addr %s22, 16
          %s502 = scalar_lea.hbm %s4, %s501
          %s504 = sshll.u32 %s494, 4
          %s505 = int_to_ptr.vmem [resolvable:$true] %s504
          %507 = dma.vmem_to_hbm [thread:$0]  %s505, 16, %s502, %s492
        $region48: #{tpu_custom_call.1} parent=35 // pred_fallthru
          _
      $region36: #{tpu_custom_call.1} parent=5 // pred_fallthru
        _
      %p508 = scmp.le.s32.totalorder 2, %s13
      // Predicated region
      $region49: #{tpu_custom_call.1} parent=5 // pred_check
        %p509 = pneg %p508
      $region50: #{tpu_custom_call.1} parent=5 // pred_check_branch
        %511 = sbr.rel (%p509) target = $region52
      $region51: #{tpu_custom_call.1} parent=5 // pred_region
        %s512 = ssub.s32 %s13, 2
        // Predicated region
        $region53: #{tpu_custom_call.1} parent=51 // pred_check
          %p513 = pneg %p145
        $region54: #{tpu_custom_call.1} parent=51 // pred_check_branch
          %515 = sbr.rel (%p513) target = $region56
        $region55: #{tpu_custom_call.1} parent=51 // pred_region
          %s516 = sand.u32 %s130, 1
          %s517 = scalar_lea.sflag [#allocation5], %s516
          %s518 = sand.u32 %s130, 1
          %s519 = scalar_lea.vmem [#allocation4], %s518
          %520 = dma.done %s517, 16
        $region56: #{tpu_custom_call.1} parent=51 // pred_fallthru
          _
      $region52: #{tpu_custom_call.1} parent=5 // pred_fallthru
        _
    $region6: #{tpu_custom_call.1} parent=1 // loop_footer
      %s17 = sadd.s32 1, %s13
    $region7: #{tpu_custom_call.1} parent=1 // loop_footer_branch
      %12 = sbr.rel target = $region3
    $region8: #{tpu_custom_call.1} parent=1 // loop_exit
      _
    %521 = vsyncpa [#allocation5], 1
    %s522 = scalar_lea.sflag [#allocation5], 1
    %523 = vsyncpa %s522, 1

</llo_original>
